<compile_context>
chip_gen: v6e
topology: v6e:2x2x1
jax: 0.10.0
libtpu: 0.0.40
codegen_flags: <defaults>
</compile_context>

<pallas_src>
import jax
import jax.numpy as jnp
from jax.experimental import pallas as pl
from jax.experimental.pallas import tpu as pltpu


# ----------------------------------------------------------------------------
# Parameter construction (deterministic, synthetic; BN folded to scale/bias)
# ----------------------------------------------------------------------------
def make_mv2block_params(key, inp, oup, expansion=4, eps=1e-5):
    hidden = int(inp * expansion)
    ks = jax.random.split(key, 15)

    def bn_fold(kg, kb, km, kv, c):
        gamma = 1.0 + 0.1 * jax.random.normal(kg, (c,), jnp.float32)
        beta = 0.1 * jax.random.normal(kb, (c,), jnp.float32)
        mean = 0.1 * jax.random.normal(km, (c,), jnp.float32)
        var = 1.0 + 0.1 * jax.random.uniform(kv, (c,), jnp.float32)
        scale = gamma / jnp.sqrt(var + eps)
        bias = beta - mean * scale
        return scale.reshape(1, c), bias.reshape(1, c)

    # conv1 (1x1, inp -> hidden), stored as (inp, hidden) matmul weight
    w1 = 0.2 * jax.random.normal(ks[0], (inp, hidden), jnp.float32)
    s1, b1 = bn_fold(ks[1], ks[2], ks[3], ks[4], hidden)
    # depthwise 3x3, stored as (9, hidden): row 3*dy+dx holds tap (dy, dx)
    wdw = 0.2 * jax.random.normal(ks[5], (9, hidden), jnp.float32)
    s2, b2 = bn_fold(ks[6], ks[7], ks[8], ks[9], hidden)
    # conv3 (1x1, hidden -> oup), stored as (hidden, oup)
    w3 = 0.2 * jax.random.normal(ks[10], (hidden, oup), jnp.float32)
    s3, b3 = bn_fold(ks[11], ks[12], ks[13], ks[14], oup)

    return dict(w1=w1, s1=s1, b1=b1, wdw=wdw, s2=s2, b2=b2,
                w3=w3, s3=s3, b3=b3)


# ----------------------------------------------------------------------------
# Pallas kernel + wrapper
# ----------------------------------------------------------------------------
def mv2block_pallas(x_nchw, params, *, stride=1):
    # TODO(synk): stride=2 depthwise downsampling path not implemented
    assert stride == 1
    B, C, H, W = x_nchw.shape
    hidden = params["w1"].shape[1]
    oup = params["w3"].shape[1]
    use_res = (stride == 1 and C == oup)
    N = B * H * W                                   # fused lane dimension

    # NCHW -> (C, B*H*W): channels on sublanes, fused batch*spatial on lanes.
    x = jnp.transpose(x_nchw, (1, 0, 2, 3)).reshape(C, N)

    # Fold BN scales into conv weights (wrapper side, zero kernel cost) and
    # lay weights out as (out_c, in_c) for the (out, in) @ (in, N) matmuls.
    w1 = (params["w1"] * params["s1"]).T.astype(jnp.float32)     # (hidden, C)
    b1 = params["b1"].reshape(hidden, 1).astype(jnp.float32)
    wdw = (params["wdw"] * params["s2"]).T.astype(jnp.float32)   # (hidden, 9)
    b2 = params["b2"].reshape(hidden, 1).astype(jnp.float32)
    w3 = (params["w3"] * params["s3"]).T.astype(jnp.float32)     # (oup, hidden)
    b3 = params["b3"].reshape(oup, 1).astype(jnp.float32)

    # Per-tap validity masks over the fused lane index n = b*H*W + i*W + j.
    # Tap (oy, ox) reads lane n + oy*W + ox; it is valid iff (i+oy, j+ox)
    # lies inside the same image (this also kills cross-image wrap-around).
    n_idx = jnp.arange(N, dtype=jnp.int32)
    row = (n_idx // W) % H
    col = n_idx % W
    mask_rows = []
    shifts = []
    for oy in (-1, 0, 1):
        row_ok = (row + oy >= 0) & (row + oy < H)
        for ox in (-1, 0, 1):
            col_ok = (col + ox >= 0) & (col + ox < W)
            mask_rows.append((row_ok & col_ok).astype(jnp.float32))
            shifts.append(oy * W + ox)
    mask = jnp.stack(mask_rows, axis=0)                          # (9, N)

    def kernel(x_ref, w1_ref, b1_ref, wdw_ref, b2_ref, w3_ref, b3_ref,
               mask_ref, o_ref):
        xv = x_ref[...]                                          # (C, N)

        # ---- 1x1 expand + bias + SiLU (MXU, lane-dense) ----
        h = jnp.dot(w1_ref[...], xv, preferred_element_type=jnp.float32)
        h = h + b1_ref[...]
        h = h * jax.nn.sigmoid(h)                                # (hidden, N)

        # ---- depthwise 3x3: 9 shifted whole-slab multiply-adds ----
        taps = wdw_ref[...]                                      # (hidden, 9)
        mv = mask_ref[...]                                       # (9, N)
        dw = None
        for k, s in enumerate(shifts):
            shifted = h if s == 0 else pltpu.roll(h, shift=(-s) % N, axis=1)
            term = shifted * mv[k:k + 1, :] * taps[:, k:k + 1]
            dw = term if dw is None else dw + term
        dw = dw + b2_ref[...]
        dw = dw * jax.nn.sigmoid(dw)                             # (hidden, N)

        # ---- 1x1 project + bias (+ residual) (MXU, lane-dense) ----
        y = jnp.dot(w3_ref[...], dw, preferred_element_type=jnp.float32)
        y = y + b3_ref[...]
        if use_res:
            y = y + xv
        o_ref[...] = y.astype(o_ref.dtype)                       # (oup, N)

    def fs(shape):
        return pl.BlockSpec(shape, lambda _i, _n=len(shape): (0,) * _n)

    out = pl.pallas_call(
        kernel,
        out_shape=jax.ShapeDtypeStruct((oup, N), jnp.float32),
        grid=(1,),
        in_specs=[
            fs((C, N)),
            fs((hidden, C)), fs((hidden, 1)),
            fs((hidden, 9)), fs((hidden, 1)),
            fs((oup, hidden)), fs((oup, 1)),
            fs((9, N)),
        ],
        out_specs=fs((oup, N)),
        compiler_params=pltpu.CompilerParams(
            dimension_semantics=("arbitrary",)),
    )(x, w1, b1, wdw, b2, w3, b3, mask)

    # (oup, B*H*W) -> NCHW
    return jnp.transpose(out.reshape(oup, B, H, W), (1, 0, 2, 3))


# ----------------------------------------------------------------------------
# Plain-JAX reference (same math, no Pallas, unfolded BN)
# ----------------------------------------------------------------------------
def mv2block_reference(x_nchw, params):
    hi = jax.lax.Precision.HIGHEST
    x = jnp.transpose(x_nchw, (0, 2, 3, 1))                       # NHWC
    B, H, W, C = x.shape
    r = lambda v: v.reshape(1, 1, 1, -1)

    h = jnp.einsum("bhwc,cd->bhwd", x, params["w1"], precision=hi)
    h = h * r(params["s1"]) + r(params["b1"])
    h = h * jax.nn.sigmoid(h)

    padded = jnp.pad(h, ((0, 0), (1, 1), (1, 1), (0, 0)))
    dw = jnp.zeros_like(h)
    for dy in range(3):
        for dx in range(3):
            dw = dw + padded[:, dy:dy + H, dx:dx + W, :] * r(params["wdw"][3 * dy + dx])
    dw = dw * r(params["s2"]) + r(params["b2"])
    dw = dw * jax.nn.sigmoid(dw)

    y = jnp.einsum("bhwd,de->bhwe", dw, params["w3"], precision=hi)
    y = y * r(params["s3"]) + r(params["b3"])
    if params["w3"].shape[1] == C:
        y = y + x
    return jnp.transpose(y, (0, 3, 1, 2))


if __name__ == "__main__":
    key = jax.random.PRNGKey(0)
    kx, kp = jax.random.split(key)

    B, inp, oup, H, W = 2, 4, 4, 16, 16          # stride=1, expansion=4 -> hidden=16
    x = jax.random.normal(kx, (B, inp, H, W), jnp.float32)
    params = make_mv2block_params(kp, inp, oup, expansion=4)

    out = mv2block_pallas(x, params, stride=1)
    jax.block_until_ready(out)

    ref = mv2block_reference(x, params)
    assert out.shape == (B, oup, H, W)
    max_err = float(jnp.max(jnp.abs(out - ref)))
    if not jnp.allclose(out, ref, rtol=2e-2, atol=2e-2):
        raise AssertionError(f"kernel mismatch vs reference, max abs err {max_err:e}")

    print("KERNEL_OK")
</pallas_src>

<mosaic_0001>
module attributes {stable_mosaic.version = 11 : i64} {
  func.func @kernel(%arg0: i32, %arg1: memref<4x512xf32, #tpu.memory_space<vmem>>, %arg2: memref<16x4xf32, #tpu.memory_space<vmem>>, %arg3: memref<16x1xf32, #tpu.memory_space<vmem>>, %arg4: memref<16x9xf32, #tpu.memory_space<vmem>>, %arg5: memref<16x1xf32, #tpu.memory_space<vmem>>, %arg6: memref<4x16xf32, #tpu.memory_space<vmem>>, %arg7: memref<4x1xf32, #tpu.memory_space<vmem>>, %arg8: memref<9x512xf32, #tpu.memory_space<vmem>>, %arg9: memref<4x512xf32, #tpu.memory_space<vmem>>) attributes {dimension_semantics = [#tpu.dimension_semantics<arbitrary>], iteration_bounds = array<i64: 1>, scalar_prefetch = 0 : i64, scratch_operands = 0 : i64, tpu.core_type = #tpu.core_type<tc>, window_params = [{pipeline_mode = #tpu.pipeline_mode<synchronous>, transform_indices = @transform_0, window_bounds = array<i64: 4, 512>}, {pipeline_mode = #tpu.pipeline_mode<synchronous>, transform_indices = @transform_1, window_bounds = array<i64: 16, 4>}, {pipeline_mode = #tpu.pipeline_mode<synchronous>, transform_indices = @transform_2, window_bounds = array<i64: 16, 1>}, {pipeline_mode = #tpu.pipeline_mode<synchronous>, transform_indices = @transform_3, window_bounds = array<i64: 16, 9>}, {pipeline_mode = #tpu.pipeline_mode<synchronous>, transform_indices = @transform_4, window_bounds = array<i64: 16, 1>}, {pipeline_mode = #tpu.pipeline_mode<synchronous>, transform_indices = @transform_5, window_bounds = array<i64: 4, 16>}, {pipeline_mode = #tpu.pipeline_mode<synchronous>, transform_indices = @transform_6, window_bounds = array<i64: 4, 1>}, {pipeline_mode = #tpu.pipeline_mode<synchronous>, transform_indices = @transform_7, window_bounds = array<i64: 9, 512>}, {pipeline_mode = #tpu.pipeline_mode<synchronous>, transform_indices = @transform_8, window_bounds = array<i64: 4, 512>}]} {
    %c0 = arith.constant 0 : index
    %c0_0 = arith.constant 0 : index
    %0 = vector.load %arg1[%c0, %c0_0] : memref<4x512xf32, #tpu.memory_space<vmem>>, vector<4x512xf32>
    %c0_1 = arith.constant 0 : index
    %c0_2 = arith.constant 0 : index
    %1 = vector.load %arg2[%c0_1, %c0_2] : memref<16x4xf32, #tpu.memory_space<vmem>>, vector<16x4xf32>
    %cst = arith.constant dense<0.000000e+00> : vector<16x512xf32>
    %2 = tpu.matmul %1, %0, %cst {dimension_numbers = #tpu.dot_dimension_numbers<[1], [0], [0], [1], [0, 0, 1, 1], [], []>} : vector<16x4xf32>, vector<4x512xf32>, vector<16x512xf32> -> vector<16x512xf32>
    %c0_3 = arith.constant 0 : index
    %c0_4 = arith.constant 0 : index
    %3 = vector.load %arg3[%c0_3, %c0_4] : memref<16x1xf32, #tpu.memory_space<vmem>>, vector<16x1xf32>
    %4 = vector.broadcast %3 : vector<16x1xf32> to vector<16x512xf32>
    %5 = arith.addf %2, %4 : vector<16x512xf32>
    %6 = arith.negf %5 : vector<16x512xf32>
    %7 = math.exp %6 : vector<16x512xf32>
    %cst_5 = arith.constant 1.000000e+00 : f32
    %8 = vector.broadcast %cst_5 : f32 to vector<16x512xf32>
    %9 = arith.addf %8, %7 : vector<16x512xf32>
    %10 = arith.divf %8, %9 : vector<16x512xf32>
    %11 = arith.mulf %5, %10 : vector<16x512xf32>
    %c0_6 = arith.constant 0 : index
    %c0_7 = arith.constant 0 : index
    %12 = vector.load %arg4[%c0_6, %c0_7] : memref<16x9xf32, #tpu.memory_space<vmem>>, vector<16x9xf32>
    %c0_8 = arith.constant 0 : index
    %c0_9 = arith.constant 0 : index
    %13 = vector.load %arg8[%c0_8, %c0_9] : memref<9x512xf32, #tpu.memory_space<vmem>>, vector<9x512xf32>
    %c17_i32 = arith.constant 17 : i32
    %14 = tpu.dynamic_rotate %11 by %c17_i32 dim 1 : vector<16x512xf32>, i32 -> vector<16x512xf32>
    %15 = vector.extract_strided_slice %13 {offsets = [0, 0], sizes = [1, 512], strides = [1, 1]} : vector<9x512xf32> to vector<1x512xf32>
    %16 = vector.broadcast %15 : vector<1x512xf32> to vector<16x512xf32>
    %17 = arith.mulf %14, %16 : vector<16x512xf32>
    %18 = vector.extract_strided_slice %12 {offsets = [0, 0], sizes = [16, 1], strides = [1, 1]} : vector<16x9xf32> to vector<16x1xf32>
    %19 = vector.broadcast %18 : vector<16x1xf32> to vector<16x512xf32>
    %20 = arith.mulf %17, %19 : vector<16x512xf32>
    %c16_i32 = arith.constant 16 : i32
    %21 = tpu.dynamic_rotate %11 by %c16_i32 dim 1 : vector<16x512xf32>, i32 -> vector<16x512xf32>
    %22 = vector.extract_strided_slice %13 {offsets = [1, 0], sizes = [1, 512], strides = [1, 1]} : vector<9x512xf32> to vector<1x512xf32>
    %23 = vector.broadcast %22 : vector<1x512xf32> to vector<16x512xf32>
    %24 = arith.mulf %21, %23 : vector<16x512xf32>
    %25 = vector.extract_strided_slice %12 {offsets = [0, 1], sizes = [16, 1], strides = [1, 1]} : vector<16x9xf32> to vector<16x1xf32>
    %26 = vector.broadcast %25 : vector<16x1xf32> to vector<16x512xf32>
    %27 = arith.mulf %24, %26 : vector<16x512xf32>
    %28 = arith.addf %20, %27 : vector<16x512xf32>
    %c15_i32 = arith.constant 15 : i32
    %29 = tpu.dynamic_rotate %11 by %c15_i32 dim 1 : vector<16x512xf32>, i32 -> vector<16x512xf32>
    %30 = vector.extract_strided_slice %13 {offsets = [2, 0], sizes = [1, 512], strides = [1, 1]} : vector<9x512xf32> to vector<1x512xf32>
    %31 = vector.broadcast %30 : vector<1x512xf32> to vector<16x512xf32>
    %32 = arith.mulf %29, %31 : vector<16x512xf32>
    %33 = vector.extract_strided_slice %12 {offsets = [0, 2], sizes = [16, 1], strides = [1, 1]} : vector<16x9xf32> to vector<16x1xf32>
    %34 = vector.broadcast %33 : vector<16x1xf32> to vector<16x512xf32>
    %35 = arith.mulf %32, %34 : vector<16x512xf32>
    %36 = arith.addf %28, %35 : vector<16x512xf32>
    %c1_i32 = arith.constant 1 : i32
    %37 = tpu.dynamic_rotate %11 by %c1_i32 dim 1 : vector<16x512xf32>, i32 -> vector<16x512xf32>
    %38 = vector.extract_strided_slice %13 {offsets = [3, 0], sizes = [1, 512], strides = [1, 1]} : vector<9x512xf32> to vector<1x512xf32>
    %39 = vector.broadcast %38 : vector<1x512xf32> to vector<16x512xf32>
    %40 = arith.mulf %37, %39 : vector<16x512xf32>
    %41 = vector.extract_strided_slice %12 {offsets = [0, 3], sizes = [16, 1], strides = [1, 1]} : vector<16x9xf32> to vector<16x1xf32>
    %42 = vector.broadcast %41 : vector<16x1xf32> to vector<16x512xf32>
    %43 = arith.mulf %40, %42 : vector<16x512xf32>
    %44 = arith.addf %36, %43 : vector<16x512xf32>
    %45 = vector.extract_strided_slice %13 {offsets = [4, 0], sizes = [1, 512], strides = [1, 1]} : vector<9x512xf32> to vector<1x512xf32>
    %46 = vector.broadcast %45 : vector<1x512xf32> to vector<16x512xf32>
    %47 = arith.mulf %11, %46 : vector<16x512xf32>
    %48 = vector.extract_strided_slice %12 {offsets = [0, 4], sizes = [16, 1], strides = [1, 1]} : vector<16x9xf32> to vector<16x1xf32>
    %49 = vector.broadcast %48 : vector<16x1xf32> to vector<16x512xf32>
    %50 = arith.mulf %47, %49 : vector<16x512xf32>
    %51 = arith.addf %44, %50 : vector<16x512xf32>
    %c511_i32 = arith.constant 511 : i32
    %52 = tpu.dynamic_rotate %11 by %c511_i32 dim 1 : vector<16x512xf32>, i32 -> vector<16x512xf32>
    %53 = vector.extract_strided_slice %13 {offsets = [5, 0], sizes = [1, 512], strides = [1, 1]} : vector<9x512xf32> to vector<1x512xf32>
    %54 = vector.broadcast %53 : vector<1x512xf32> to vector<16x512xf32>
    %55 = arith.mulf %52, %54 : vector<16x512xf32>
    %56 = vector.extract_strided_slice %12 {offsets = [0, 5], sizes = [16, 1], strides = [1, 1]} : vector<16x9xf32> to vector<16x1xf32>
    %57 = vector.broadcast %56 : vector<16x1xf32> to vector<16x512xf32>
    %58 = arith.mulf %55, %57 : vector<16x512xf32>
    %59 = arith.addf %51, %58 : vector<16x512xf32>
    %c497_i32 = arith.constant 497 : i32
    %60 = tpu.dynamic_rotate %11 by %c497_i32 dim 1 : vector<16x512xf32>, i32 -> vector<16x512xf32>
    %61 = vector.extract_strided_slice %13 {offsets = [6, 0], sizes = [1, 512], strides = [1, 1]} : vector<9x512xf32> to vector<1x512xf32>
    %62 = vector.broadcast %61 : vector<1x512xf32> to vector<16x512xf32>
    %63 = arith.mulf %60, %62 : vector<16x512xf32>
    %64 = vector.extract_strided_slice %12 {offsets = [0, 6], sizes = [16, 1], strides = [1, 1]} : vector<16x9xf32> to vector<16x1xf32>
    %65 = vector.broadcast %64 : vector<16x1xf32> to vector<16x512xf32>
    %66 = arith.mulf %63, %65 : vector<16x512xf32>
    %67 = arith.addf %59, %66 : vector<16x512xf32>
    %c496_i32 = arith.constant 496 : i32
    %68 = tpu.dynamic_rotate %11 by %c496_i32 dim 1 : vector<16x512xf32>, i32 -> vector<16x512xf32>
    %69 = vector.extract_strided_slice %13 {offsets = [7, 0], sizes = [1, 512], strides = [1, 1]} : vector<9x512xf32> to vector<1x512xf32>
    %70 = vector.broadcast %69 : vector<1x512xf32> to vector<16x512xf32>
    %71 = arith.mulf %68, %70 : vector<16x512xf32>
    %72 = vector.extract_strided_slice %12 {offsets = [0, 7], sizes = [16, 1], strides = [1, 1]} : vector<16x9xf32> to vector<16x1xf32>
    %73 = vector.broadcast %72 : vector<16x1xf32> to vector<16x512xf32>
    %74 = arith.mulf %71, %73 : vector<16x512xf32>
    %75 = arith.addf %67, %74 : vector<16x512xf32>
    %c495_i32 = arith.constant 495 : i32
    %76 = tpu.dynamic_rotate %11 by %c495_i32 dim 1 : vector<16x512xf32>, i32 -> vector<16x512xf32>
    %77 = vector.extract_strided_slice %13 {offsets = [8, 0], sizes = [1, 512], strides = [1, 1]} : vector<9x512xf32> to vector<1x512xf32>
    %78 = vector.broadcast %77 : vector<1x512xf32> to vector<16x512xf32>
    %79 = arith.mulf %76, %78 : vector<16x512xf32>
    %80 = vector.extract_strided_slice %12 {offsets = [0, 8], sizes = [16, 1], strides = [1, 1]} : vector<16x9xf32> to vector<16x1xf32>
    %81 = vector.broadcast %80 : vector<16x1xf32> to vector<16x512xf32>
    %82 = arith.mulf %79, %81 : vector<16x512xf32>
    %83 = arith.addf %75, %82 : vector<16x512xf32>
    %c0_10 = arith.constant 0 : index
    %c0_11 = arith.constant 0 : index
    %84 = vector.load %arg5[%c0_10, %c0_11] : memref<16x1xf32, #tpu.memory_space<vmem>>, vector<16x1xf32>
    %85 = vector.broadcast %84 : vector<16x1xf32> to vector<16x512xf32>
    %86 = arith.addf %83, %85 : vector<16x512xf32>
    %87 = arith.negf %86 : vector<16x512xf32>
    %88 = math.exp %87 : vector<16x512xf32>
    %cst_12 = arith.constant 1.000000e+00 : f32
    %89 = vector.broadcast %cst_12 : f32 to vector<16x512xf32>
    %90 = arith.addf %89, %88 : vector<16x512xf32>
    %91 = arith.divf %89, %90 : vector<16x512xf32>
    %92 = arith.mulf %86, %91 : vector<16x512xf32>
    %c0_13 = arith.constant 0 : index
    %c0_14 = arith.constant 0 : index
    %93 = vector.load %arg6[%c0_13, %c0_14] : memref<4x16xf32, #tpu.memory_space<vmem>>, vector<4x16xf32>
    %cst_15 = arith.constant dense<0.000000e+00> : vector<4x512xf32>
    %94 = tpu.matmul %93, %92, %cst_15 {dimension_numbers = #tpu.dot_dimension_numbers<[1], [0], [0], [1], [0, 0, 1, 1], [], []>} : vector<4x16xf32>, vector<16x512xf32>, vector<4x512xf32> -> vector<4x512xf32>
    %c0_16 = arith.constant 0 : index
    %c0_17 = arith.constant 0 : index
    %95 = vector.load %arg7[%c0_16, %c0_17] : memref<4x1xf32, #tpu.memory_space<vmem>>, vector<4x1xf32>
    %96 = vector.broadcast %95 : vector<4x1xf32> to vector<4x512xf32>
    %97 = arith.addf %94, %96 : vector<4x512xf32>
    %98 = arith.addf %97, %0 : vector<4x512xf32>
    %c0_18 = arith.constant 0 : index
    %c0_19 = arith.constant 0 : index
    %99 = vector.load %arg9[%c0_18, %c0_19] : memref<4x512xf32, #tpu.memory_space<vmem>>, vector<4x512xf32>
    tpu.vector_store %arg9[%c0_18, %c0_19], %98 {strides = array<i32>} : memref<4x512xf32, #tpu.memory_space<vmem>>, vector<4x512xf32>,
    return
  }
  func.func @transform_0(%arg0: i32) -> (i32, i32) {
    %c0_i32 = arith.constant 0 : i32
    %c0_i32_0 = arith.constant 0 : i32
    %c0_i32_1 = arith.constant 0 : i32
    return %c0_i32, %c0_i32_0 : i32, i32
  }
  func.func @transform_1(%arg0: i32) -> (i32, i32) {
    %c0_i32 = arith.constant 0 : i32
    %c0_i32_0 = arith.constant 0 : i32
    %c0_i32_1 = arith.constant 0 : i32
    return %c0_i32, %c0_i32_0 : i32, i32
  }
  func.func @transform_2(%arg0: i32) -> (i32, i32) {
    %c0_i32 = arith.constant 0 : i32
    %c0_i32_0 = arith.constant 0 : i32
    %c0_i32_1 = arith.constant 0 : i32
    return %c0_i32, %c0_i32_0 : i32, i32
  }
  func.func @transform_3(%arg0: i32) -> (i32, i32) {
    %c0_i32 = arith.constant 0 : i32
    %c0_i32_0 = arith.constant 0 : i32
    %c0_i32_1 = arith.constant 0 : i32
    return %c0_i32, %c0_i32_0 : i32, i32
  }
  func.func @transform_4(%arg0: i32) -> (i32, i32) {
    %c0_i32 = arith.constant 0 : i32
    %c0_i32_0 = arith.constant 0 : i32
    %c0_i32_1 = arith.constant 0 : i32
    return %c0_i32, %c0_i32_0 : i32, i32
  }
  func.func @transform_5(%arg0: i32) -> (i32, i32) {
    %c0_i32 = arith.constant 0 : i32
    %c0_i32_0 = arith.constant 0 : i32
    %c0_i32_1 = arith.constant 0 : i32
    return %c0_i32, %c0_i32_0 : i32, i32
  }
  func.func @transform_6(%arg0: i32) -> (i32, i32) {
    %c0_i32 = arith.constant 0 : i32
    %c0_i32_0 = arith.constant 0 : i32
    %c0_i32_1 = arith.constant 0 : i32
    return %c0_i32, %c0_i32_0 : i32, i32
  }
  func.func @transform_7(%arg0: i32) -> (i32, i32) {
    %c0_i32 = arith.constant 0 : i32
    %c0_i32_0 = arith.constant 0 : i32
    %c0_i32_1 = arith.constant 0 : i32
    return %c0_i32, %c0_i32_0 : i32, i32
  }
  func.func @transform_8(%arg0: i32) -> (i32, i32) {
    %c0_i32 = arith.constant 0 : i32
    %c0_i32_0 = arith.constant 0 : i32
    %c0_i32_1 = arith.constant 0 : i32
    return %c0_i32, %c0_i32_0 : i32, i32
  }
}

</mosaic_0001>

<llo_original>
// kernel: tpu_custom_call.1
$region0: #{tpu_custom_call.1}
  #allocation0 [shape = 'u32[]', space=smem, size = 0x4, offset = 0x4, fixed_abs, tag = 'smem constant byte address 0x4 - core index']
  #allocation1 [shape = 'u32[144,128]{1,0:T(1,128)}', space=vmem, size = 0x12000, scoped, tag = 'internal scratch']
  %s0 = inlined_call_operand.hbm [shape: f32[4,512], index: 0, kind: input, shape index: {}]
  %s1 = inlined_call_operand.vmem [shape: f32[16,4], index: 1, kind: input, shape index: {}]
  %s2 = inlined_call_operand.vmem [shape: f32[16,1], index: 2, kind: input, shape index: {}]
  %s3 = inlined_call_operand.hbm [shape: f32[16,9], index: 3, kind: input, shape index: {}]
  %s4 = inlined_call_operand.vmem [shape: f32[16,1], index: 4, kind: input, shape index: {}]
  %s5 = inlined_call_operand.vmem [shape: f32[4,16], index: 5, kind: input, shape index: {}]
  %s6 = inlined_call_operand.vmem [shape: f32[4,1], index: 6, kind: input, shape index: {}]
  %s7 = inlined_call_operand.vmem [shape: f32[9,512], index: 7, kind: input, shape index: {}]
  %s8 = inlined_call_operand.hbm [shape: f32[4,512], index: 8, kind: output, shape index: {}]
  %s9 = sld [smem:[#allocation0]]
  $region50: #{tpu_custom_call.1} parent=0
    _
  %s11 = ssub.s32 1, %s9
  %s12 = scalar_select 0, %s11, %s9
  $region1: #{tpu_custom_call.1} parent=0
    #allocation2 [shape = 'u8[8192]{0}', space=vmem, size = 0x2000, scoped, tag = 'input window, operand 0, single buffered']
    #allocation3 [shape = 's32[1]{0}', space=sflag, size = 0x4, scoped, tag = 'scoped memory for tpu_custom_call.1']
    #allocation4 [shape = 's32[1]{0}', space=sflag, size = 0x4, scoped, tag = 'scoped memory for tpu_custom_call.1']
    #allocation5 [shape = 'u8[8192]{0}', space=vmem, size = 0x2000, scoped, tag = 'input window, operand 3, single buffered']
    #allocation6 [shape = 's32[1]{0}', space=sflag, size = 0x4, scoped, tag = 'scoped memory for tpu_custom_call.1']
    #allocation7 [shape = 'u8[8192]{0}', space=vmem, size = 0x2000, scoped, tag = 'output window, operand 0, single buffered']
    %13 = vsyncpa [#allocation3], 0
    %14 = vsyncpa [#allocation6], 0
    %15 = vsyncpa [#allocation4], 0
    // Predicated region
    $region2: #{tpu_custom_call.1} parent=1 // pred_check
      _
    $region3: #{tpu_custom_call.1} parent=1 // pred_check_branch
      %17 = sbr.rel (0) target = $region5
    $region4: #{tpu_custom_call.1} parent=1 // pred_region
      %s19 = ssub.s32 256, 256
      %20 = vsyncadd [#allocation3], %s19
      %s22 = sshll.u32 [#allocation2], 4
      %s23 = int_to_ptr.vmem [resolvable:$true] %s22
      %25 = dma.hbm_to_vmem [thread:$0]  %s0, 256, %s23, [#allocation3]
    $region5: #{tpu_custom_call.1} parent=1 // pred_fallthru
      _
    // Predicated region
    $region6: #{tpu_custom_call.1} parent=1 // pred_check
      _
    $region7: #{tpu_custom_call.1} parent=1 // pred_check_branch
      %27 = sbr.rel (0) target = $region9
    $region8: #{tpu_custom_call.1} parent=1 // pred_region
      _
    $region9: #{tpu_custom_call.1} parent=1 // pred_fallthru
      _
    // Predicated region
    $region10: #{tpu_custom_call.1} parent=1 // pred_check
      _
    $region11: #{tpu_custom_call.1} parent=1 // pred_check_branch
      %29 = sbr.rel (0) target = $region13
    $region12: #{tpu_custom_call.1} parent=1 // pred_region
      _
    $region13: #{tpu_custom_call.1} parent=1 // pred_fallthru
      _
    // Predicated region
    $region14: #{tpu_custom_call.1} parent=1 // pred_check
      _
    $region15: #{tpu_custom_call.1} parent=1 // pred_check_branch
      %31 = sbr.rel (0) target = $region17
    $region16: #{tpu_custom_call.1} parent=1 // pred_region
      %s33 = ssub.s32 256, 256
      %34 = vsyncadd [#allocation6], %s33
      %s35 = sshll.u32 [#allocation5], 4
      %s36 = int_to_ptr.vmem [resolvable:$true] %s35
      %41 = dma.hbm_to_vmem [thread:$0]  %s3, 256, %s36, [#allocation6], 128, 128, 8
    $region17: #{tpu_custom_call.1} parent=1 // pred_fallthru
      _
    // Predicated region
    $region18: #{tpu_custom_call.1} parent=1 // pred_check
      _
    $region19: #{tpu_custom_call.1} parent=1 // pred_check_branch
      %43 = sbr.rel (0) target = $region21
    $region20: #{tpu_custom_call.1} parent=1 // pred_region
      _
    $region21: #{tpu_custom_call.1} parent=1 // pred_fallthru
      _
    // Predicated region
    $region22: #{tpu_custom_call.1} parent=1 // pred_check
      _
    $region23: #{tpu_custom_call.1} parent=1 // pred_check_branch
      %45 = sbr.rel (0) target = $region25
    $region24: #{tpu_custom_call.1} parent=1 // pred_region
      _
    $region25: #{tpu_custom_call.1} parent=1 // pred_fallthru
      _
    // Predicated region
    $region26: #{tpu_custom_call.1} parent=1 // pred_check
      _
    $region27: #{tpu_custom_call.1} parent=1 // pred_check_branch
      %47 = sbr.rel (0) target = $region29
    $region28: #{tpu_custom_call.1} parent=1 // pred_region
      _
    $region29: #{tpu_custom_call.1} parent=1 // pred_fallthru
      _
    // Predicated region
    $region30: #{tpu_custom_call.1} parent=1 // pred_check
      _
    $region31: #{tpu_custom_call.1} parent=1 // pred_check_branch
      %49 = sbr.rel (0) target = $region33
    $region32: #{tpu_custom_call.1} parent=1 // pred_region
      _
    $region33: #{tpu_custom_call.1} parent=1 // pred_fallthru
      _
    // Predicated region
    $region34: #{tpu_custom_call.1} parent=1 // pred_check
      _
    $region35: #{tpu_custom_call.1} parent=1 // pred_check_branch
      %51 = sbr.rel (0) target = $region37
    $region36: #{tpu_custom_call.1} parent=1 // pred_region
      %52 = dma.done [#allocation3], 256
    $region37: #{tpu_custom_call.1} parent=1 // pred_fallthru
      _
    // Predicated region
    $region38: #{tpu_custom_call.1} parent=1 // pred_check
      _
    $region39: #{tpu_custom_call.1} parent=1 // pred_check_branch
      %54 = sbr.rel (0) target = $region41
    $region40: #{tpu_custom_call.1} parent=1 // pred_region
      %55 = dma.done [#allocation6], 256
    $region41: #{tpu_custom_call.1} parent=1 // pred_fallthru
      _
    %v56 = vld [vmem:[#allocation2] sm:$0xff]
    %v57 = vld [vmem:[#allocation2 + $0x8] sm:$0xff]
    %v58 = vld [vmem:[%s1] sm:$0xff]
    %v59 = vld [vmem:[%s1 + $0x8] sm:$0xff]
    %v60 = vld [vmem:[%s2] sm:$0xff]
    %v61 = vld [vmem:[%s2 + $0x8] sm:$0xff]
    %63 = vset.pattern.permute.xlu0 0
    %64 = vperm.xlu0 %63, %v60
    %v65 = vpop.permute.xlu0 %64
    %68 = vset.pattern.permute.xlu0 0
    %69 = vperm.xlu0 %68, %v61
    %v70 = vpop.permute.xlu0 %69
    %v74 = vcombine.high %v56, %v56
    %v75 = vcombine.high %v57, %v57
    %vm76 = vcmask 31744
    %v78 = vsel %vm76, %v58, 0
    %v81 = vsel %vm76, %v59, 0
    %vm83 = vcmask 1043456
    %v84 = vsel %vm83, %v56, 0
    %v86 = vsel %vm83, %v74, 0
    %v88 = vsel %vm83, %v57, 0
    %v90 = vsel %vm83, %v75, 0
    %92 = vmatprep.subr.mxu0 0.0
    %93 = vmatpush1.msra.mxu0 0.0
    %94 = vmatprep.subr.mxu0 0.0
    %95 = vmatpush1.msra.mxu0 0.0
    %96 = vmatprep.subr.mxu0 0.0
    %97 = vmatpush1.msra.mxu0 0.0
    %98 = vmatprep.subr.mxu0 0.0
    %99 = vmatpush1.msra.mxu0 0.0
    %100 = vmatprep.subr.mxu0 0.0
    %101 = vmatpush1.msra.mxu0 0.0
    %102 = vmatprep.subr.mxu0 0.0
    %103 = vmatpush1.msra.mxu0 0.0
    %104 = vmatprep.subr.mxu0 0.0
    %105 = vmatpush1.msra.mxu0 0.0
    %106 = vmatprep.subr.mxu0 0.0
    %107 = vmatpush1.msra.mxu0 0.0
    %108 = vmatprep.subr.mxu0 0.0
    %109 = vmatpush1.msra.mxu0 0.0
    %110 = vmatprep.subr.mxu0 0.0
    %111 = vmatpush1.msra.mxu0 0.0
    %112 = vmatprep.subr.mxu0 0.0
    %113 = vmatpush1.msra.mxu0 0.0
    %114 = vmatprep.subr.mxu0 0.0
    %115 = vmatpush1.msra.mxu0 0.0
    %116 = vmatprep.subr.mxu0 0.0
    %117 = vmatpush1.msra.mxu0 0.0
    %118 = vmatprep.subr.mxu0 0.0
    %119 = vmatpush1.msra.mxu0 0.0
    %120 = vmatprep.subr.mxu0 0.0
    %121 = vmatpush1.msra.mxu0 0.0
    %122 = vmatprep.subr.mxu0 %v86
    %123 = vmatpush1.msra.mxu0 %v84
    %124 = vmatprep.subr.mxu0 0.0
    %125 = vmatpush2.msra.mxu0 0.0
    %126 = vmatprep.subr.mxu0 0.0
    %127 = vmatpush2.msra.mxu0 0.0
    %128 = vmatprep.subr.mxu0 0.0
    %129 = vmatpush2.msra.mxu0 0.0
    %130 = vmatprep.subr.mxu0 0.0
    %131 = vmatpush2.msra.mxu0 0.0
    %132 = vmatprep.subr.mxu0 0.0
    %133 = vmatpush2.msra.mxu0 0.0
    %134 = vmatprep.subr.mxu0 0.0
    %135 = vmatpush2.msra.mxu0 0.0
    %136 = vmatprep.subr.mxu0 0.0
    %137 = vmatpush2.msra.mxu0 0.0
    %138 = vmatprep.subr.mxu0 0.0
    %139 = vmatpush2.msra.mxu0 0.0
    %140 = vmatprep.subr.mxu0 0.0
    %141 = vmatpush2.msra.mxu0 0.0
    %142 = vmatprep.subr.mxu0 0.0
    %143 = vmatpush2.msra.mxu0 0.0
    %144 = vmatprep.subr.mxu0 0.0
    %145 = vmatpush2.msra.mxu0 0.0
    %146 = vmatprep.subr.mxu0 0.0
    %147 = vmatpush2.msra.mxu0 0.0
    %148 = vmatprep.subr.mxu0 0.0
    %149 = vmatpush2.msra.mxu0 0.0
    %150 = vmatprep.subr.mxu0 0.0
    %151 = vmatpush2.msra.mxu0 0.0
    %152 = vmatprep.subr.mxu0 0.0
    %153 = vmatpush2.msra.mxu0 0.0
    %154 = vmatprep.subr.mxu0 0.0
    %155 = vmatpush2.msra.mxu0 0.0
    %156 = vmatprep.mubr.f32.mxu0 0.0
    %157 = vmatmul.mubr.f32.gmra.mxu0 %v78
    %v158 = vpop.f32.mrf.mxu0
    %v159 = vadd.f32 %v65, %v158
    %v160 = vpop.f32.mrf.mxu0
    %v161 = vadd.f32 %v65, %v160
    %162 = vmatprep.mubr.f32.mxu0 0.0
    %163 = vmatmul.mubr.f32.gmra.mxu0 %v81
    %v164 = vpop.f32.mrf.mxu0
    %v165 = vadd.f32 %v70, %v164
    %v166 = vpop.f32.mrf.mxu0
    %v167 = vadd.f32 %v70, %v166
    %168 = vdwg.mxu0
    %169 = vmatprep.subr.mxu0 0.0
    %170 = vmatpush1.msra.mxu0 0.0
    %171 = vmatprep.subr.mxu0 0.0
    %172 = vmatpush1.msra.mxu0 0.0
    %173 = vmatprep.subr.mxu0 0.0
    %174 = vmatpush1.msra.mxu0 0.0
    %175 = vmatprep.subr.mxu0 0.0
    %176 = vmatpush1.msra.mxu0 0.0
    %177 = vmatprep.subr.mxu0 0.0
    %178 = vmatpush1.msra.mxu0 0.0
    %179 = vmatprep.subr.mxu0 0.0
    %180 = vmatpush1.msra.mxu0 0.0
    %181 = vmatprep.subr.mxu0 0.0
    %182 = vmatpush1.msra.mxu0 0.0
    %183 = vmatprep.subr.mxu0 0.0
    %184 = vmatpush1.msra.mxu0 0.0
    %185 = vmatprep.subr.mxu0 0.0
    %186 = vmatpush1.msra.mxu0 0.0
    %187 = vmatprep.subr.mxu0 0.0
    %188 = vmatpush1.msra.mxu0 0.0
    %189 = vmatprep.subr.mxu0 0.0
    %190 = vmatpush1.msra.mxu0 0.0
    %191 = vmatprep.subr.mxu0 0.0
    %192 = vmatpush1.msra.mxu0 0.0
    %193 = vmatprep.subr.mxu0 0.0
    %194 = vmatpush1.msra.mxu0 0.0
    %195 = vmatprep.subr.mxu0 0.0
    %196 = vmatpush1.msra.mxu0 0.0
    %197 = vmatprep.subr.mxu0 0.0
    %198 = vmatpush1.msra.mxu0 0.0
    %199 = vmatprep.subr.mxu0 %v90
    %200 = vmatpush1.msra.mxu0 %v88
    %201 = vmatprep.subr.mxu0 0.0
    %202 = vmatpush2.msra.mxu0 0.0
    %203 = vmatprep.subr.mxu0 0.0
    %204 = vmatpush2.msra.mxu0 0.0
    %205 = vmatprep.subr.mxu0 0.0
    %206 = vmatpush2.msra.mxu0 0.0
    %207 = vmatprep.subr.mxu0 0.0
    %208 = vmatpush2.msra.mxu0 0.0
    %209 = vmatprep.subr.mxu0 0.0
    %210 = vmatpush2.msra.mxu0 0.0
    %211 = vmatprep.subr.mxu0 0.0
    %212 = vmatpush2.msra.mxu0 0.0
    %213 = vmatprep.subr.mxu0 0.0
    %214 = vmatpush2.msra.mxu0 0.0
    %215 = vmatprep.subr.mxu0 0.0
    %216 = vmatpush2.msra.mxu0 0.0
    %217 = vmatprep.subr.mxu0 0.0
    %218 = vmatpush2.msra.mxu0 0.0
    %219 = vmatprep.subr.mxu0 0.0
    %220 = vmatpush2.msra.mxu0 0.0
    %221 = vmatprep.subr.mxu0 0.0
    %222 = vmatpush2.msra.mxu0 0.0
    %223 = vmatprep.subr.mxu0 0.0
    %224 = vmatpush2.msra.mxu0 0.0
    %225 = vmatprep.subr.mxu0 0.0
    %226 = vmatpush2.msra.mxu0 0.0
    %227 = vmatprep.subr.mxu0 0.0
    %228 = vmatpush2.msra.mxu0 0.0
    %229 = vmatprep.subr.mxu0 0.0
    %230 = vmatpush2.msra.mxu0 0.0
    %231 = vmatprep.subr.mxu0 0.0
    %232 = vmatpush2.msra.mxu0 0.0
    %233 = vmatprep.mubr.f32.mxu0 0.0
    %234 = vmatmul.mubr.f32.gmra.mxu0 %v78
    %v235 = vpop.f32.mrf.mxu0
    %v236 = vadd.f32 %v65, %v235
    %v237 = vpop.f32.mrf.mxu0
    %v238 = vadd.f32 %v65, %v237
    %239 = vmatprep.mubr.f32.mxu0 0.0
    %240 = vmatmul.mubr.f32.gmra.mxu0 %v81
    %v241 = vpop.f32.mrf.mxu0
    %v242 = vadd.f32 %v70, %v241
    %v243 = vpop.f32.mrf.mxu0
    %v244 = vadd.f32 %v70, %v243
    %245 = vdwg.mxu0
    %v246 = vxor.u32 %v159, 2147483648
    %v247 = vxor.u32 %v161, 2147483648
    %v248 = vxor.u32 %v236, 2147483648
    %v249 = vxor.u32 %v238, 2147483648
    %v250 = vxor.u32 %v165, 2147483648
    %v251 = vxor.u32 %v167, 2147483648
    %v252 = vxor.u32 %v242, 2147483648
    %v253 = vxor.u32 %v244, 2147483648
    %v254 = vmul.f32 %v246, 1.442695
    %v255 = vpow.pop %v254
    %v256 = vmul.f32 %v247, 1.442695
    %v257 = vpow.pop %v256
    %v258 = vmul.f32 %v248, 1.442695
    %v259 = vpow.pop %v258
    %v260 = vmul.f32 %v249, 1.442695
    %v261 = vpow.pop %v260
    %v262 = vmul.f32 %v250, 1.442695
    %v263 = vpow.pop %v262
    %v264 = vmul.f32 %v251, 1.442695
    %v265 = vpow.pop %v264
    %v266 = vmul.f32 %v252, 1.442695
    %v267 = vpow.pop %v266
    %v268 = vmul.f32 %v253, 1.442695
    %v269 = vpow.pop %v268
    %v270 = vadd.f32 %v255, 1.0
    %v271 = vadd.f32 %v257, 1.0
    %v272 = vadd.f32 %v259, 1.0
    %v273 = vadd.f32 %v261, 1.0
    %v274 = vadd.f32 %v263, 1.0
    %v275 = vadd.f32 %v265, 1.0
    %v276 = vadd.f32 %v267, 1.0
    %v277 = vadd.f32 %v269, 1.0
    %v278 = vrcp.pop %v270
    %v279 = vmul.f32 1.0, %v278
    %v280 = vrcp.pop %v271
    %v281 = vmul.f32 1.0, %v280
    %v282 = vrcp.pop %v272
    %v283 = vmul.f32 1.0, %v282
    %v284 = vrcp.pop %v273
    %v285 = vmul.f32 1.0, %v284
    %v286 = vrcp.pop %v274
    %v287 = vmul.f32 1.0, %v286
    %v288 = vrcp.pop %v275
    %v289 = vmul.f32 1.0, %v288
    %v290 = vrcp.pop %v276
    %v291 = vmul.f32 1.0, %v290
    %v292 = vrcp.pop %v277
    %v293 = vmul.f32 1.0, %v292
    %v294 = vmul.f32 %v159, %v279
    %v295 = vmul.f32 %v161, %v281
    %v296 = vmul.f32 %v236, %v283
    %v297 = vmul.f32 %v238, %v285
    %v298 = vmul.f32 %v165, %v287
    %v299 = vmul.f32 %v167, %v289
    %v300 = vmul.f32 %v242, %v291
    %v301 = vmul.f32 %v244, %v293
    %v302 = vld [vmem:[#allocation5] sm:$0xff]
    %v303 = vld [vmem:[#allocation5 + $0x8] sm:$0xff]
    %v304 = vld [vmem:[%s7] sm:$0xff]
    %v305 = vld [vmem:[%s7 + $0x8] sm:$0xff]
    %v306 = vld [vmem:[%s7 + $0x10] sm:$0xff]
    %v307 = vld [vmem:[%s7 + $0x18] sm:$0xff]
    %v308 = vld [vmem:[%s7 + $0x20] sm:$0x1]
    %v309 = vld [vmem:[%s7 + $0x28] sm:$0x1]
    %v310 = vld [vmem:[%s7 + $0x30] sm:$0x1]
    %v311 = vld [vmem:[%s7 + $0x38] sm:$0x1]
    %312 = vrot.lane.b32.xlu0 %v294, 17
    %v313 = vpop.permute.xlu0 %312
    %314 = vrot.lane.b32.xlu0 %v298, 17
    %v315 = vpop.permute.xlu0 %314
    %316 = vrot.lane.b32.xlu0 %v295, 17
    %v317 = vpop.permute.xlu0 %316
    %318 = vrot.lane.b32.xlu0 %v299, 17
    %v319 = vpop.permute.xlu0 %318
    %320 = vrot.lane.b32.xlu0 %v296, 17
    %v321 = vpop.permute.xlu0 %320
    %322 = vrot.lane.b32.xlu0 %v300, 17
    %v323 = vpop.permute.xlu0 %322
    %324 = vrot.lane.b32.xlu0 %v297, 17
    %v325 = vpop.permute.xlu0 %324
    %326 = vrot.lane.b32.xlu0 %v301, 17
    %v327 = vpop.permute.xlu0 %326
    %v328 = vlaneseq
    %v329 = vand.u32 %v328, 127
    %vm330 = vcmp.lt.s32.totalorder %v329, 17
    %v331 = vsel %vm330, %v321, %v325
    %v332 = vsel %vm330, %v323, %v327
    %v333 = vsel %vm330, %v317, %v321
    %v334 = vsel %vm330, %v319, %v323
    %v335 = vsel %vm330, %v313, %v317
    %v336 = vsel %vm330, %v315, %v319
    %v337 = vsel %vm330, %v325, %v313
    %v338 = vsel %vm330, %v327, %v315
    %v339 = vlaneseq
    %v340 = vshrl.u32 %v339, 7
    %v341 = vsub.s32 0, %v340
    %v342 = vrot.slane %v304, %v341
    %v343 = vlaneseq
    %v344 = vshrl.u32 %v343, 7
    %v345 = vsub.s32 0, %v344
    %v346 = vrot.slane %v305, %v345
    %v347 = vlaneseq
    %v348 = vshrl.u32 %v347, 7
    %v349 = vsub.s32 0, %v348
    %v350 = vrot.slane %v306, %v349
    %v351 = vlaneseq
    %v352 = vshrl.u32 %v351, 7
    %v353 = vsub.s32 0, %v352
    %v354 = vrot.slane %v307, %v353
    %v355 = vmul.f32 %v337, %v342
    %v356 = vmul.f32 %v335, %v346
    %v357 = vmul.f32 %v333, %v350
    %v358 = vmul.f32 %v331, %v354
    %v359 = vmul.f32 %v338, %v342
    %v360 = vmul.f32 %v336, %v346
    %v361 = vmul.f32 %v334, %v350
    %v362 = vmul.f32 %v332, %v354
    %364 = vset.pattern.permute.xlu0 0
    %365 = vperm.xlu0 %364, %v302
    %v366 = vpop.permute.xlu0 %365
    %369 = vset.pattern.permute.xlu0 0
    %370 = vperm.xlu0 %369, %v303
    %v371 = vpop.permute.xlu0 %370
    %v373 = vmul.f32 %v355, %v366
    %v374 = vmul.f32 %v356, %v366
    %v375 = vmul.f32 %v357, %v366
    %v376 = vmul.f32 %v358, %v366
    %v377 = vmul.f32 %v359, %v371
    %v378 = vmul.f32 %v360, %v371
    %v379 = vmul.f32 %v361, %v371
    %v380 = vmul.f32 %v362, %v371
    %381 = vrot.lane.b32.xlu0 %v294, 16
    %v382 = vpop.permute.xlu0 %381
    %383 = vrot.lane.b32.xlu0 %v298, 16
    %v384 = vpop.permute.xlu0 %383
    %385 = vrot.lane.b32.xlu0 %v295, 16
    %v386 = vpop.permute.xlu0 %385
    %387 = vrot.lane.b32.xlu0 %v299, 16
    %v388 = vpop.permute.xlu0 %387
    %389 = vrot.lane.b32.xlu0 %v296, 16
    %v390 = vpop.permute.xlu0 %389
    %391 = vrot.lane.b32.xlu0 %v300, 16
    %v392 = vpop.permute.xlu0 %391
    %393 = vrot.lane.b32.xlu0 %v297, 16
    %v394 = vpop.permute.xlu0 %393
    %395 = vrot.lane.b32.xlu0 %v301, 16
    %v396 = vpop.permute.xlu0 %395
    %vm397 = vcmp.lt.s32.totalorder %v329, 16
    %v398 = vsel %vm397, %v390, %v394
    %v399 = vsel %vm397, %v392, %v396
    %v400 = vsel %vm397, %v386, %v390
    %v401 = vsel %vm397, %v388, %v392
    %v402 = vsel %vm397, %v382, %v386
    %v403 = vsel %vm397, %v384, %v388
    %v404 = vsel %vm397, %v394, %v382
    %v405 = vsel %vm397, %v396, %v384
    %v406 = vlaneseq
    %v407 = vshrl.u32 %v406, 7
    %v408 = vsub.s32 1, %v407
    %v409 = vrot.slane %v304, %v408
    %v410 = vlaneseq
    %v411 = vshrl.u32 %v410, 7
    %v412 = vsub.s32 1, %v411
    %v413 = vrot.slane %v305, %v412
    %v414 = vlaneseq
    %v415 = vshrl.u32 %v414, 7
    %v416 = vsub.s32 1, %v415
    %v417 = vrot.slane %v306, %v416
    %v418 = vlaneseq
    %v419 = vshrl.u32 %v418, 7
    %v420 = vsub.s32 1, %v419
    %v421 = vrot.slane %v307, %v420
    %v422 = vmul.f32 %v404, %v409
    %v423 = vmul.f32 %v402, %v413
    %v424 = vmul.f32 %v400, %v417
    %v425 = vmul.f32 %v398, %v421
    %v426 = vmul.f32 %v405, %v409
    %v427 = vmul.f32 %v403, %v413
    %v428 = vmul.f32 %v401, %v417
    %v429 = vmul.f32 %v399, %v421
    %430 = vset.pattern.permute.xlu0 1
    %431 = vperm.xlu0 %430, %v302
    %v432 = vpop.permute.xlu0 %431
    %434 = vset.pattern.permute.xlu0 1
    %435 = vperm.xlu0 %434, %v303
    %v436 = vpop.permute.xlu0 %435
    %v438 = vmul.f32 %v422, %v432
    %v439 = vmul.f32 %v423, %v432
    %v440 = vmul.f32 %v424, %v432
    %v441 = vmul.f32 %v425, %v432
    %v442 = vmul.f32 %v426, %v436
    %v443 = vmul.f32 %v427, %v436
    %v444 = vmul.f32 %v428, %v436
    %v445 = vmul.f32 %v429, %v436
    %v446 = vadd.f32 %v373, %v438
    %v447 = vadd.f32 %v374, %v439
    %v448 = vadd.f32 %v375, %v440
    %v449 = vadd.f32 %v376, %v441
    %v450 = vadd.f32 %v377, %v442
    %v451 = vadd.f32 %v378, %v443
    %v452 = vadd.f32 %v379, %v444
    %v453 = vadd.f32 %v380, %v445
    %454 = vrot.lane.b32.xlu0 %v294, 15
    %v455 = vpop.permute.xlu0 %454
    %456 = vrot.lane.b32.xlu0 %v298, 15
    %v457 = vpop.permute.xlu0 %456
    %458 = vrot.lane.b32.xlu0 %v295, 15
    %v459 = vpop.permute.xlu0 %458
    %460 = vrot.lane.b32.xlu0 %v299, 15
    %v461 = vpop.permute.xlu0 %460
    %462 = vrot.lane.b32.xlu0 %v296, 15
    %v463 = vpop.permute.xlu0 %462
    %464 = vrot.lane.b32.xlu0 %v300, 15
    %v465 = vpop.permute.xlu0 %464
    %466 = vrot.lane.b32.xlu0 %v297, 15
    %v467 = vpop.permute.xlu0 %466
    %468 = vrot.lane.b32.xlu0 %v301, 15
    %v469 = vpop.permute.xlu0 %468
    %vm470 = vcmp.lt.s32.totalorder %v329, 15
    %v471 = vsel %vm470, %v463, %v467
    %v472 = vsel %vm470, %v465, %v469
    %v473 = vsel %vm470, %v459, %v463
    %v474 = vsel %vm470, %v461, %v465
    %v475 = vsel %vm470, %v455, %v459
    %v476 = vsel %vm470, %v457, %v461
    %v477 = vsel %vm470, %v467, %v455
    %v478 = vsel %vm470, %v469, %v457
    %v479 = vlaneseq
    %v480 = vshrl.u32 %v479, 7
    %v481 = vsub.s32 2, %v480
    %v482 = vrot.slane %v304, %v481
    %v483 = vlaneseq
    %v484 = vshrl.u32 %v483, 7
    %v485 = vsub.s32 2, %v484
    %v486 = vrot.slane %v305, %v485
    %v487 = vlaneseq
    %v488 = vshrl.u32 %v487, 7
    %v489 = vsub.s32 2, %v488
    %v490 = vrot.slane %v306, %v489
    %v491 = vlaneseq
    %v492 = vshrl.u32 %v491, 7
    %v493 = vsub.s32 2, %v492
    %v494 = vrot.slane %v307, %v493
    %v495 = vmul.f32 %v477, %v482
    %v496 = vmul.f32 %v475, %v486
    %v497 = vmul.f32 %v473, %v490
    %v498 = vmul.f32 %v471, %v494
    %v499 = vmul.f32 %v478, %v482
    %v500 = vmul.f32 %v476, %v486
    %v501 = vmul.f32 %v474, %v490
    %v502 = vmul.f32 %v472, %v494
    %503 = vset.pattern.permute.xlu0 2
    %504 = vperm.xlu0 %503, %v302
    %v505 = vpop.permute.xlu0 %504
    %507 = vset.pattern.permute.xlu0 2
    %508 = vperm.xlu0 %507, %v303
    %v509 = vpop.permute.xlu0 %508
    %v511 = vmul.f32 %v495, %v505
    %v512 = vmul.f32 %v496, %v505
    %v513 = vmul.f32 %v497, %v505
    %v514 = vmul.f32 %v498, %v505
    %v515 = vmul.f32 %v499, %v509
    %v516 = vmul.f32 %v500, %v509
    %v517 = vmul.f32 %v501, %v509
    %v518 = vmul.f32 %v502, %v509
    %v519 = vadd.f32 %v446, %v511
    %v520 = vadd.f32 %v447, %v512
    %v521 = vadd.f32 %v448, %v513
    %v522 = vadd.f32 %v449, %v514
    %v523 = vadd.f32 %v450, %v515
    %v524 = vadd.f32 %v451, %v516
    %v525 = vadd.f32 %v452, %v517
    %v526 = vadd.f32 %v453, %v518
    %527 = vrot.lane.b32.xlu0 %v294, 1
    %v528 = vpop.permute.xlu0 %527
    %529 = vrot.lane.b32.xlu0 %v298, 1
    %v530 = vpop.permute.xlu0 %529
    %531 = vrot.lane.b32.xlu0 %v295, 1
    %v532 = vpop.permute.xlu0 %531
    %533 = vrot.lane.b32.xlu0 %v299, 1
    %v534 = vpop.permute.xlu0 %533
    %535 = vrot.lane.b32.xlu0 %v296, 1
    %v536 = vpop.permute.xlu0 %535
    %537 = vrot.lane.b32.xlu0 %v300, 1
    %v538 = vpop.permute.xlu0 %537
    %539 = vrot.lane.b32.xlu0 %v297, 1
    %v540 = vpop.permute.xlu0 %539
    %541 = vrot.lane.b32.xlu0 %v301, 1
    %v542 = vpop.permute.xlu0 %541
    %vm543 = vcmp.lt.s32.totalorder %v329, 1
    %v544 = vsel %vm543, %v536, %v540
    %v545 = vsel %vm543, %v538, %v542
    %v546 = vsel %vm543, %v532, %v536
    %v547 = vsel %vm543, %v534, %v538
    %v548 = vsel %vm543, %v528, %v532
    %v549 = vsel %vm543, %v530, %v534
    %v550 = vsel %vm543, %v540, %v528
    %v551 = vsel %vm543, %v542, %v530
    %v552 = vlaneseq
    %v553 = vshrl.u32 %v552, 7
    %v554 = vsub.s32 3, %v553
    %v555 = vrot.slane %v304, %v554
    %v556 = vlaneseq
    %v557 = vshrl.u32 %v556, 7
    %v558 = vsub.s32 3, %v557
    %v559 = vrot.slane %v305, %v558
    %v560 = vlaneseq
    %v561 = vshrl.u32 %v560, 7
    %v562 = vsub.s32 3, %v561
    %v563 = vrot.slane %v306, %v562
    %v564 = vlaneseq
    %v565 = vshrl.u32 %v564, 7
    %v566 = vsub.s32 3, %v565
    %v567 = vrot.slane %v307, %v566
    %v568 = vmul.f32 %v550, %v555
    %v569 = vmul.f32 %v548, %v559
    %v570 = vmul.f32 %v546, %v563
    %v571 = vmul.f32 %v544, %v567
    %v572 = vmul.f32 %v551, %v555
    %v573 = vmul.f32 %v549, %v559
    %v574 = vmul.f32 %v547, %v563
    %v575 = vmul.f32 %v545, %v567
    %576 = vset.pattern.permute.xlu0 3
    %577 = vperm.xlu0 %576, %v302
    %v578 = vpop.permute.xlu0 %577
    %580 = vset.pattern.permute.xlu0 3
    %581 = vperm.xlu0 %580, %v303
    %v582 = vpop.permute.xlu0 %581
    %v584 = vmul.f32 %v568, %v578
    %v585 = vmul.f32 %v569, %v578
    %v586 = vmul.f32 %v570, %v578
    %v587 = vmul.f32 %v571, %v578
    %v588 = vmul.f32 %v572, %v582
    %v589 = vmul.f32 %v573, %v582
    %v590 = vmul.f32 %v574, %v582
    %v591 = vmul.f32 %v575, %v582
    %v592 = vadd.f32 %v519, %v584
    %v593 = vadd.f32 %v520, %v585
    %v594 = vadd.f32 %v521, %v586
    %v595 = vadd.f32 %v522, %v587
    %v596 = vadd.f32 %v523, %v588
    %v597 = vadd.f32 %v524, %v589
    %v598 = vadd.f32 %v525, %v590
    %v599 = vadd.f32 %v526, %v591
    %v600 = vlaneseq
    %v601 = vshrl.u32 %v600, 7
    %v602 = vsub.s32 4, %v601
    %v603 = vrot.slane %v304, %v602
    %v604 = vlaneseq
    %v605 = vshrl.u32 %v604, 7
    %v606 = vsub.s32 4, %v605
    %v607 = vrot.slane %v305, %v606
    %v608 = vlaneseq
    %v609 = vshrl.u32 %v608, 7
    %v610 = vsub.s32 4, %v609
    %v611 = vrot.slane %v306, %v610
    %v612 = vlaneseq
    %v613 = vshrl.u32 %v612, 7
    %v614 = vsub.s32 4, %v613
    %v615 = vrot.slane %v307, %v614
    %v616 = vmul.f32 %v294, %v603
    %v617 = vmul.f32 %v295, %v607
    %v618 = vmul.f32 %v296, %v611
    %v619 = vmul.f32 %v297, %v615
    %v620 = vmul.f32 %v298, %v603
    %v621 = vmul.f32 %v299, %v607
    %v622 = vmul.f32 %v300, %v611
    %v623 = vmul.f32 %v301, %v615
    %624 = vset.pattern.permute.xlu0 4
    %625 = vperm.xlu0 %624, %v302
    %v626 = vpop.permute.xlu0 %625
    %628 = vset.pattern.permute.xlu0 4
    %629 = vperm.xlu0 %628, %v303
    %v630 = vpop.permute.xlu0 %629
    %v632 = vmul.f32 %v616, %v626
    %v633 = vmul.f32 %v617, %v626
    %v634 = vmul.f32 %v618, %v626
    %v635 = vmul.f32 %v619, %v626
    %v636 = vmul.f32 %v620, %v630
    %v637 = vmul.f32 %v621, %v630
    %v638 = vmul.f32 %v622, %v630
    %v639 = vmul.f32 %v623, %v630
    %v640 = vadd.f32 %v592, %v632
    %v641 = vadd.f32 %v593, %v633
    %v642 = vadd.f32 %v594, %v634
    %v643 = vadd.f32 %v595, %v635
    %v644 = vadd.f32 %v596, %v636
    %v645 = vadd.f32 %v597, %v637
    %v646 = vadd.f32 %v598, %v638
    %v647 = vadd.f32 %v599, %v639
    %648 = vrot.lane.b32.xlu0 %v294, 127
    %v649 = vpop.permute.xlu0 %648
    %650 = vrot.lane.b32.xlu0 %v298, 127
    %v651 = vpop.permute.xlu0 %650
    %652 = vrot.lane.b32.xlu0 %v295, 127
    %v653 = vpop.permute.xlu0 %652
    %654 = vrot.lane.b32.xlu0 %v299, 127
    %v655 = vpop.permute.xlu0 %654
    %656 = vrot.lane.b32.xlu0 %v296, 127
    %v657 = vpop.permute.xlu0 %656
    %658 = vrot.lane.b32.xlu0 %v300, 127
    %v659 = vpop.permute.xlu0 %658
    %660 = vrot.lane.b32.xlu0 %v297, 127
    %v661 = vpop.permute.xlu0 %660
    %662 = vrot.lane.b32.xlu0 %v301, 127
    %v663 = vpop.permute.xlu0 %662
    %vm664 = vcmp.lt.s32.totalorder %v329, 127
    %v665 = vsel %vm664, %v657, %v661
    %v666 = vsel %vm664, %v659, %v663
    %v667 = vsel %vm664, %v653, %v657
    %v668 = vsel %vm664, %v655, %v659
    %v669 = vsel %vm664, %v649, %v653
    %v670 = vsel %vm664, %v651, %v655
    %v671 = vsel %vm664, %v661, %v649
    %v672 = vsel %vm664, %v663, %v651
    %v673 = vlaneseq
    %v674 = vshrl.u32 %v673, 7
    %v675 = vsub.s32 5, %v674
    %v676 = vrot.slane %v304, %v675
    %v677 = vlaneseq
    %v678 = vshrl.u32 %v677, 7
    %v679 = vsub.s32 5, %v678
    %v680 = vrot.slane %v305, %v679
    %v681 = vlaneseq
    %v682 = vshrl.u32 %v681, 7
    %v683 = vsub.s32 5, %v682
    %v684 = vrot.slane %v306, %v683
    %v685 = vlaneseq
    %v686 = vshrl.u32 %v685, 7
    %v687 = vsub.s32 5, %v686
    %v688 = vrot.slane %v307, %v687
    %v689 = vmul.f32 %v669, %v676
    %v690 = vmul.f32 %v667, %v680
    %v691 = vmul.f32 %v665, %v684
    %v692 = vmul.f32 %v671, %v688
    %v693 = vmul.f32 %v670, %v676
    %v694 = vmul.f32 %v668, %v680
    %v695 = vmul.f32 %v666, %v684
    %v696 = vmul.f32 %v672, %v688
    %697 = vset.pattern.permute.xlu0 5
    %698 = vperm.xlu0 %697, %v302
    %v699 = vpop.permute.xlu0 %698
    %701 = vset.pattern.permute.xlu0 5
    %702 = vperm.xlu0 %701, %v303
    %v703 = vpop.permute.xlu0 %702
    %v705 = vmul.f32 %v689, %v699
    %v706 = vmul.f32 %v690, %v699
    %v707 = vmul.f32 %v691, %v699
    %v708 = vmul.f32 %v692, %v699
    %v709 = vmul.f32 %v693, %v703
    %v710 = vmul.f32 %v694, %v703
    %v711 = vmul.f32 %v695, %v703
    %v712 = vmul.f32 %v696, %v703
    %v713 = vadd.f32 %v640, %v705
    %v714 = vadd.f32 %v641, %v706
    %v715 = vadd.f32 %v642, %v707
    %v716 = vadd.f32 %v643, %v708
    %v717 = vadd.f32 %v644, %v709
    %v718 = vadd.f32 %v645, %v710
    %v719 = vadd.f32 %v646, %v711
    %v720 = vadd.f32 %v647, %v712
    %721 = vrot.lane.b32.xlu0 %v294, 113
    %v722 = vpop.permute.xlu0 %721
    %723 = vrot.lane.b32.xlu0 %v298, 113
    %v724 = vpop.permute.xlu0 %723
    %725 = vrot.lane.b32.xlu0 %v295, 113
    %v726 = vpop.permute.xlu0 %725
    %727 = vrot.lane.b32.xlu0 %v299, 113
    %v728 = vpop.permute.xlu0 %727
    %729 = vrot.lane.b32.xlu0 %v296, 113
    %v730 = vpop.permute.xlu0 %729
    %731 = vrot.lane.b32.xlu0 %v300, 113
    %v732 = vpop.permute.xlu0 %731
    %733 = vrot.lane.b32.xlu0 %v297, 113
    %v734 = vpop.permute.xlu0 %733
    %735 = vrot.lane.b32.xlu0 %v301, 113
    %v736 = vpop.permute.xlu0 %735
    %vm737 = vcmp.lt.s32.totalorder %v329, 113
    %v738 = vsel %vm737, %v730, %v734
    %v739 = vsel %vm737, %v732, %v736
    %v740 = vsel %vm737, %v726, %v730
    %v741 = vsel %vm737, %v728, %v732
    %v742 = vsel %vm737, %v722, %v726
    %v743 = vsel %vm737, %v724, %v728
    %v744 = vsel %vm737, %v734, %v722
    %v745 = vsel %vm737, %v736, %v724
    %v746 = vlaneseq
    %v747 = vshrl.u32 %v746, 7
    %v748 = vsub.s32 6, %v747
    %v749 = vrot.slane %v304, %v748
    %v750 = vlaneseq
    %v751 = vshrl.u32 %v750, 7
    %v752 = vsub.s32 6, %v751
    %v753 = vrot.slane %v305, %v752
    %v754 = vlaneseq
    %v755 = vshrl.u32 %v754, 7
    %v756 = vsub.s32 6, %v755
    %v757 = vrot.slane %v306, %v756
    %v758 = vlaneseq
    %v759 = vshrl.u32 %v758, 7
    %v760 = vsub.s32 6, %v759
    %v761 = vrot.slane %v307, %v760
    %v762 = vmul.f32 %v742, %v749
    %v763 = vmul.f32 %v740, %v753
    %v764 = vmul.f32 %v738, %v757
    %v765 = vmul.f32 %v744, %v761
    %v766 = vmul.f32 %v743, %v749
    %v767 = vmul.f32 %v741, %v753
    %v768 = vmul.f32 %v739, %v757
    %v769 = vmul.f32 %v745, %v761
    %770 = vset.pattern.permute.xlu0 6
    %771 = vperm.xlu0 %770, %v302
    %v772 = vpop.permute.xlu0 %771
    %774 = vset.pattern.permute.xlu0 6
    %775 = vperm.xlu0 %774, %v303
    %v776 = vpop.permute.xlu0 %775
    %v778 = vmul.f32 %v762, %v772
    %v779 = vmul.f32 %v763, %v772
    %v780 = vmul.f32 %v764, %v772
    %v781 = vmul.f32 %v765, %v772
    %v782 = vmul.f32 %v766, %v776
    %v783 = vmul.f32 %v767, %v776
    %v784 = vmul.f32 %v768, %v776
    %v785 = vmul.f32 %v769, %v776
    %v786 = vadd.f32 %v713, %v778
    %v787 = vadd.f32 %v714, %v779
    %v788 = vadd.f32 %v715, %v780
    %v789 = vadd.f32 %v716, %v781
    %v790 = vadd.f32 %v717, %v782
    %v791 = vadd.f32 %v718, %v783
    %v792 = vadd.f32 %v719, %v784
    %v793 = vadd.f32 %v720, %v785
    %794 = vrot.lane.b32.xlu0 %v294, 112
    %v795 = vpop.permute.xlu0 %794
    %796 = vrot.lane.b32.xlu0 %v298, 112
    %v797 = vpop.permute.xlu0 %796
    %798 = vrot.lane.b32.xlu0 %v295, 112
    %v799 = vpop.permute.xlu0 %798
    %800 = vrot.lane.b32.xlu0 %v299, 112
    %v801 = vpop.permute.xlu0 %800
    %802 = vrot.lane.b32.xlu0 %v296, 112
    %v803 = vpop.permute.xlu0 %802
    %804 = vrot.lane.b32.xlu0 %v300, 112
    %v805 = vpop.permute.xlu0 %804
    %806 = vrot.lane.b32.xlu0 %v297, 112
    %v807 = vpop.permute.xlu0 %806
    %808 = vrot.lane.b32.xlu0 %v301, 112
    %v809 = vpop.permute.xlu0 %808
    %vm810 = vcmp.lt.s32.totalorder %v329, 112
    %v811 = vsel %vm810, %v803, %v807
    %v812 = vsel %vm810, %v805, %v809
    %v813 = vsel %vm810, %v799, %v803
    %v814 = vsel %vm810, %v801, %v805
    %v815 = vsel %vm810, %v795, %v799
    %v816 = vsel %vm810, %v797, %v801
    %v817 = vsel %vm810, %v807, %v795
    %v818 = vsel %vm810, %v809, %v797
    %v819 = vlaneseq
    %v820 = vshrl.u32 %v819, 7
    %v821 = vsub.s32 7, %v820
    %v822 = vrot.slane %v304, %v821
    %v823 = vlaneseq
    %v824 = vshrl.u32 %v823, 7
    %v825 = vsub.s32 7, %v824
    %v826 = vrot.slane %v305, %v825
    %v827 = vlaneseq
    %v828 = vshrl.u32 %v827, 7
    %v829 = vsub.s32 7, %v828
    %v830 = vrot.slane %v306, %v829
    %v831 = vlaneseq
    %v832 = vshrl.u32 %v831, 7
    %v833 = vsub.s32 7, %v832
    %v834 = vrot.slane %v307, %v833
    %v835 = vmul.f32 %v815, %v822
    %v836 = vmul.f32 %v813, %v826
    %v837 = vmul.f32 %v811, %v830
    %v838 = vmul.f32 %v817, %v834
    %v839 = vmul.f32 %v816, %v822
    %v840 = vmul.f32 %v814, %v826
    %v841 = vmul.f32 %v812, %v830
    %v842 = vmul.f32 %v818, %v834
    %843 = vset.pattern.permute.xlu0 7
    %844 = vperm.xlu0 %843, %v302
    %v845 = vpop.permute.xlu0 %844
    %847 = vset.pattern.permute.xlu0 7
    %848 = vperm.xlu0 %847, %v303
    %v849 = vpop.permute.xlu0 %848
    %v851 = vmul.f32 %v835, %v845
    %v852 = vmul.f32 %v836, %v845
    %v853 = vmul.f32 %v837, %v845
    %v854 = vmul.f32 %v838, %v845
    %v855 = vmul.f32 %v839, %v849
    %v856 = vmul.f32 %v840, %v849
    %v857 = vmul.f32 %v841, %v849
    %v858 = vmul.f32 %v842, %v849
    %v859 = vadd.f32 %v786, %v851
    %v860 = vadd.f32 %v787, %v852
    %v861 = vadd.f32 %v788, %v853
    %v862 = vadd.f32 %v789, %v854
    %v863 = vadd.f32 %v790, %v855
    %v864 = vadd.f32 %v791, %v856
    %v865 = vadd.f32 %v792, %v857
    %v866 = vadd.f32 %v793, %v858
    %867 = vrot.lane.b32.xlu0 %v294, 111
    %v868 = vpop.permute.xlu0 %867
    %869 = vrot.lane.b32.xlu0 %v298, 111
    %v870 = vpop.permute.xlu0 %869
    %871 = vrot.lane.b32.xlu0 %v295, 111
    %v872 = vpop.permute.xlu0 %871
    %873 = vrot.lane.b32.xlu0 %v299, 111
    %v874 = vpop.permute.xlu0 %873
    %875 = vrot.lane.b32.xlu0 %v296, 111
    %v876 = vpop.permute.xlu0 %875
    %877 = vrot.lane.b32.xlu0 %v300, 111
    %v878 = vpop.permute.xlu0 %877
    %879 = vrot.lane.b32.xlu0 %v297, 111
    %v880 = vpop.permute.xlu0 %879
    %881 = vrot.lane.b32.xlu0 %v301, 111
    %v882 = vpop.permute.xlu0 %881
    %vm883 = vcmp.lt.s32.totalorder %v329, 111
    %v884 = vsel %vm883, %v876, %v880
    %v885 = vsel %vm883, %v878, %v882
    %v886 = vsel %vm883, %v872, %v876
    %v887 = vsel %vm883, %v874, %v878
    %v888 = vsel %vm883, %v868, %v872
    %v889 = vsel %vm883, %v870, %v874
    %v890 = vsel %vm883, %v880, %v868
    %v891 = vsel %vm883, %v882, %v870
    %v892 = vlaneseq
    %v893 = vshrl.u32 %v892, 7
    %v894 = vsub.s32 0, %v893
    %v895 = vrot.slane %v308, %v894
    %v896 = vlaneseq
    %v897 = vshrl.u32 %v896, 7
    %v898 = vsub.s32 0, %v897
    %v899 = vrot.slane %v309, %v898
    %v900 = vlaneseq
    %v901 = vshrl.u32 %v900, 7
    %v902 = vsub.s32 0, %v901
    %v903 = vrot.slane %v310, %v902
    %v904 = vlaneseq
    %v905 = vshrl.u32 %v904, 7
    %v906 = vsub.s32 0, %v905
    %v907 = vrot.slane %v311, %v906
    %v908 = vmul.f32 %v888, %v895
    %v909 = vmul.f32 %v886, %v899
    %v910 = vmul.f32 %v884, %v903
    %v911 = vmul.f32 %v890, %v907
    %v912 = vmul.f32 %v889, %v895
    %v913 = vmul.f32 %v887, %v899
    %v914 = vmul.f32 %v885, %v903
    %v915 = vmul.f32 %v891, %v907
    %916 = vset.pattern.permute.xlu0 8
    %917 = vperm.xlu0 %916, %v302
    %v918 = vpop.permute.xlu0 %917
    %920 = vset.pattern.permute.xlu0 8
    %921 = vperm.xlu0 %920, %v303
    %v922 = vpop.permute.xlu0 %921
    %v924 = vmul.f32 %v908, %v918
    %v925 = vmul.f32 %v909, %v918
    %v926 = vmul.f32 %v910, %v918
    %v927 = vmul.f32 %v911, %v918
    %v928 = vmul.f32 %v912, %v922
    %v929 = vmul.f32 %v913, %v922
    %v930 = vmul.f32 %v914, %v922
    %v931 = vmul.f32 %v915, %v922
    %v932 = vadd.f32 %v859, %v924
    %v933 = vadd.f32 %v860, %v925
    %v934 = vadd.f32 %v861, %v926
    %v935 = vadd.f32 %v862, %v927
    %v936 = vadd.f32 %v863, %v928
    %v937 = vadd.f32 %v864, %v929
    %v938 = vadd.f32 %v865, %v930
    %v939 = vadd.f32 %v866, %v931
    %v940 = vld [vmem:[%s4] sm:$0xff]
    %v941 = vld [vmem:[%s4 + $0x8] sm:$0xff]
    %943 = vset.pattern.permute.xlu0 0
    %944 = vperm.xlu0 %943, %v940
    %v945 = vpop.permute.xlu0 %944
    %948 = vset.pattern.permute.xlu0 0
    %949 = vperm.xlu0 %948, %v941
    %v950 = vpop.permute.xlu0 %949
    %v952 = vadd.f32 %v932, %v945
    %v953 = vadd.f32 %v933, %v945
    %v954 = vadd.f32 %v934, %v945
    %v955 = vadd.f32 %v935, %v945
    %v956 = vadd.f32 %v936, %v950
    %v957 = vadd.f32 %v937, %v950
    %v958 = vadd.f32 %v938, %v950
    %v959 = vadd.f32 %v939, %v950
    %v960 = vxor.u32 %v952, 2147483648
    %v961 = vxor.u32 %v953, 2147483648
    %v962 = vxor.u32 %v954, 2147483648
    %v963 = vxor.u32 %v955, 2147483648
    %v964 = vxor.u32 %v956, 2147483648
    %v965 = vxor.u32 %v957, 2147483648
    %v966 = vxor.u32 %v958, 2147483648
    %v967 = vxor.u32 %v959, 2147483648
    %v968 = vmul.f32 %v960, 1.442695
    %v969 = vpow.pop %v968
    %v970 = vmul.f32 %v961, 1.442695
    %v971 = vpow.pop %v970
    %v972 = vmul.f32 %v962, 1.442695
    %v973 = vpow.pop %v972
    %v974 = vmul.f32 %v963, 1.442695
    %v975 = vpow.pop %v974
    %v976 = vmul.f32 %v964, 1.442695
    %v977 = vpow.pop %v976
    %v978 = vmul.f32 %v965, 1.442695
    %v979 = vpow.pop %v978
    %v980 = vmul.f32 %v966, 1.442695
    %v981 = vpow.pop %v980
    %v982 = vmul.f32 %v967, 1.442695
    %v983 = vpow.pop %v982
    %v984 = vadd.f32 %v969, 1.0
    %v985 = vadd.f32 %v971, 1.0
    %v986 = vadd.f32 %v973, 1.0
    %v987 = vadd.f32 %v975, 1.0
    %v988 = vadd.f32 %v977, 1.0
    %v989 = vadd.f32 %v979, 1.0
    %v990 = vadd.f32 %v981, 1.0
    %v991 = vadd.f32 %v983, 1.0
    %v992 = vrcp.pop %v984
    %v993 = vmul.f32 1.0, %v992
    %v994 = vrcp.pop %v985
    %v995 = vmul.f32 1.0, %v994
    %v996 = vrcp.pop %v986
    %v997 = vmul.f32 1.0, %v996
    %v998 = vrcp.pop %v987
    %v999 = vmul.f32 1.0, %v998
    %v1000 = vrcp.pop %v988
    %v1001 = vmul.f32 1.0, %v1000
    %v1002 = vrcp.pop %v989
    %v1003 = vmul.f32 1.0, %v1002
    %v1004 = vrcp.pop %v990
    %v1005 = vmul.f32 1.0, %v1004
    %v1006 = vrcp.pop %v991
    %v1007 = vmul.f32 1.0, %v1006
    %v1008 = vmul.f32 %v952, %v993
    %v1009 = vmul.f32 %v953, %v995
    %v1010 = vmul.f32 %v954, %v997
    %v1011 = vmul.f32 %v955, %v999
    %v1012 = vmul.f32 %v956, %v1001
    %v1013 = vmul.f32 %v957, %v1003
    %v1014 = vmul.f32 %v958, %v1005
    %v1015 = vmul.f32 %v959, %v1007
    %v1016 = vld [vmem:[%s5] sm:$0xf]
    %v1017 = vld [vmem:[%s6] sm:$0xf]
    %1019 = vset.pattern.permute.xlu0 0
    %1020 = vperm.xlu0 %1019, %v1017
    %v1021 = vpop.permute.xlu0 %1020
    %vm1023 = vcmask 130048
    %v1025 = vsel %vm1023, %v1016, 0
    %1027 = vmatprep.subr.mxu0 0.0
    %1028 = vmatpush1.msra.mxu0 0.0
    %1029 = vmatprep.subr.mxu0 0.0
    %1030 = vmatpush1.msra.mxu0 0.0
    %1031 = vmatprep.subr.mxu0 0.0
    %1032 = vmatpush1.msra.mxu0 0.0
    %1033 = vmatprep.subr.mxu0 0.0
    %1034 = vmatpush1.msra.mxu0 0.0
    %1035 = vmatprep.subr.mxu0 0.0
    %1036 = vmatpush1.msra.mxu0 0.0
    %1037 = vmatprep.subr.mxu0 0.0
    %1038 = vmatpush1.msra.mxu0 0.0
    %1039 = vmatprep.subr.mxu0 0.0
    %1040 = vmatpush1.msra.mxu0 0.0
    %1041 = vmatprep.subr.mxu0 0.0
    %1042 = vmatpush1.msra.mxu0 0.0
    %1043 = vmatprep.subr.mxu0 0.0
    %1044 = vmatpush1.msra.mxu0 0.0
    %1045 = vmatprep.subr.mxu0 0.0
    %1046 = vmatpush1.msra.mxu0 0.0
    %1047 = vmatprep.subr.mxu0 0.0
    %1048 = vmatpush1.msra.mxu0 0.0
    %1049 = vmatprep.subr.mxu0 0.0
    %1050 = vmatpush1.msra.mxu0 0.0
    %1051 = vmatprep.subr.mxu0 0.0
    %1052 = vmatpush1.msra.mxu0 0.0
    %1053 = vmatprep.subr.mxu0 0.0
    %1054 = vmatpush1.msra.mxu0 0.0
    %1055 = vmatprep.subr.mxu0 %v1013
    %1056 = vmatpush1.msra.mxu0 %v1012
    %1057 = vmatprep.subr.mxu0 %v1009
    %1058 = vmatpush1.msra.mxu0 %v1008
    %1059 = vmatprep.subr.mxu0 0.0
    %1060 = vmatpush2.msra.mxu0 0.0
    %1061 = vmatprep.subr.mxu0 0.0
    %1062 = vmatpush2.msra.mxu0 0.0
    %1063 = vmatprep.subr.mxu0 0.0
    %1064 = vmatpush2.msra.mxu0 0.0
    %1065 = vmatprep.subr.mxu0 0.0
    %1066 = vmatpush2.msra.mxu0 0.0
    %1067 = vmatprep.subr.mxu0 0.0
    %1068 = vmatpush2.msra.mxu0 0.0
    %1069 = vmatprep.subr.mxu0 0.0
    %1070 = vmatpush2.msra.mxu0 0.0
    %1071 = vmatprep.subr.mxu0 0.0
    %1072 = vmatpush2.msra.mxu0 0.0
    %1073 = vmatprep.subr.mxu0 0.0
    %1074 = vmatpush2.msra.mxu0 0.0
    %1075 = vmatprep.subr.mxu0 0.0
    %1076 = vmatpush2.msra.mxu0 0.0
    %1077 = vmatprep.subr.mxu0 0.0
    %1078 = vmatpush2.msra.mxu0 0.0
    %1079 = vmatprep.subr.mxu0 0.0
    %1080 = vmatpush2.msra.mxu0 0.0
    %1081 = vmatprep.subr.mxu0 0.0
    %1082 = vmatpush2.msra.mxu0 0.0
    %1083 = vmatprep.subr.mxu0 0.0
    %1084 = vmatpush2.msra.mxu0 0.0
    %1085 = vmatprep.subr.mxu0 0.0
    %1086 = vmatpush2.msra.mxu0 0.0
    %1087 = vmatprep.subr.mxu0 0.0
    %1088 = vmatpush2.msra.mxu0 0.0
    %1089 = vmatprep.subr.mxu0 0.0
    %1090 = vmatpush2.msra.mxu0 0.0
    %1091 = vmatprep.mubr.f32.mxu0 0.0
    %1092 = vmatmul.mubr.f32.gmra.mxu0 %v1025
    %v1093 = vpop.f32.mrf.mxu0
    %v1094 = vadd.f32 %v1021, %v1093
    %v1095 = vpop.f32.mrf.mxu0
    %v1096 = vadd.f32 %v1021, %v1095
    %1097 = vdwg.mxu0
    %1098 = vmatprep.subr.mxu0 0.0
    %1099 = vmatpush1.msra.mxu0 0.0
    %1100 = vmatprep.subr.mxu0 0.0
    %1101 = vmatpush1.msra.mxu0 0.0
    %1102 = vmatprep.subr.mxu0 0.0
    %1103 = vmatpush1.msra.mxu0 0.0
    %1104 = vmatprep.subr.mxu0 0.0
    %1105 = vmatpush1.msra.mxu0 0.0
    %1106 = vmatprep.subr.mxu0 0.0
    %1107 = vmatpush1.msra.mxu0 0.0
    %1108 = vmatprep.subr.mxu0 0.0
    %1109 = vmatpush1.msra.mxu0 0.0
    %1110 = vmatprep.subr.mxu0 0.0
    %1111 = vmatpush1.msra.mxu0 0.0
    %1112 = vmatprep.subr.mxu0 0.0
    %1113 = vmatpush1.msra.mxu0 0.0
    %1114 = vmatprep.subr.mxu0 0.0
    %1115 = vmatpush1.msra.mxu0 0.0
    %1116 = vmatprep.subr.mxu0 0.0
    %1117 = vmatpush1.msra.mxu0 0.0
    %1118 = vmatprep.subr.mxu0 0.0
    %1119 = vmatpush1.msra.mxu0 0.0
    %1120 = vmatprep.subr.mxu0 0.0
    %1121 = vmatpush1.msra.mxu0 0.0
    %1122 = vmatprep.subr.mxu0 0.0
    %1123 = vmatpush1.msra.mxu0 0.0
    %1124 = vmatprep.subr.mxu0 0.0
    %1125 = vmatpush1.msra.mxu0 0.0
    %1126 = vmatprep.subr.mxu0 %v1015
    %1127 = vmatpush1.msra.mxu0 %v1014
    %1128 = vmatprep.subr.mxu0 %v1011
    %1129 = vmatpush1.msra.mxu0 %v1010
    %1130 = vmatprep.subr.mxu0 0.0
    %1131 = vmatpush2.msra.mxu0 0.0
    %1132 = vmatprep.subr.mxu0 0.0
    %1133 = vmatpush2.msra.mxu0 0.0
    %1134 = vmatprep.subr.mxu0 0.0
    %1135 = vmatpush2.msra.mxu0 0.0
    %1136 = vmatprep.subr.mxu0 0.0
    %1137 = vmatpush2.msra.mxu0 0.0
    %1138 = vmatprep.subr.mxu0 0.0
    %1139 = vmatpush2.msra.mxu0 0.0
    %1140 = vmatprep.subr.mxu0 0.0
    %1141 = vmatpush2.msra.mxu0 0.0
    %1142 = vmatprep.subr.mxu0 0.0
    %1143 = vmatpush2.msra.mxu0 0.0
    %1144 = vmatprep.subr.mxu0 0.0
    %1145 = vmatpush2.msra.mxu0 0.0
    %1146 = vmatprep.subr.mxu0 0.0
    %1147 = vmatpush2.msra.mxu0 0.0
    %1148 = vmatprep.subr.mxu0 0.0
    %1149 = vmatpush2.msra.mxu0 0.0
    %1150 = vmatprep.subr.mxu0 0.0
    %1151 = vmatpush2.msra.mxu0 0.0
    %1152 = vmatprep.subr.mxu0 0.0
    %1153 = vmatpush2.msra.mxu0 0.0
    %1154 = vmatprep.subr.mxu0 0.0
    %1155 = vmatpush2.msra.mxu0 0.0
    %1156 = vmatprep.subr.mxu0 0.0
    %1157 = vmatpush2.msra.mxu0 0.0
    %1158 = vmatprep.subr.mxu0 0.0
    %1159 = vmatpush2.msra.mxu0 0.0
    %1160 = vmatprep.subr.mxu0 0.0
    %1161 = vmatpush2.msra.mxu0 0.0
    %1162 = vmatprep.mubr.f32.mxu0 0.0
    %1163 = vmatmul.mubr.f32.gmra.mxu0 %v1025
    %v1164 = vpop.f32.mrf.mxu0
    %v1165 = vadd.f32 %v1021, %v1164
    %v1166 = vpop.f32.mrf.mxu0
    %v1167 = vadd.f32 %v1021, %v1166
    %1168 = vdwg.mxu0
    %v1171 = vadd.f32 %v1094, %v56
    %v1172 = vadd.f32 %v1096, %v74
    %v1173 = vadd.f32 %v1165, %v57
    %v1174 = vadd.f32 %v1167, %v75
    %v1179 = vcombine.low %v1171, %v1172
    %v1180 = vcombine.low %v1173, %v1174
    %1183 = vst [vmem:[#allocation7] sm:$0xff] %v1179
    %1184 = vst [vmem:[#allocation7 + $0x8] sm:$0xff] %v1180
    // Predicated region
    $region42: #{tpu_custom_call.1} parent=1 // pred_check
      _
    $region43: #{tpu_custom_call.1} parent=1 // pred_check_branch
      %1186 = sbr.rel (0) target = $region45
    $region44: #{tpu_custom_call.1} parent=1 // pred_region
      %s1188 = ssub.s32 256, 256
      %1189 = vsyncadd [#allocation4], %s1188
      %s1191 = sshll.u32 [#allocation7], 4
      %s1192 = int_to_ptr.vmem [resolvable:$true] %s1191
      %1194 = dma.vmem_to_hbm [thread:$0]  %s1192, 256, %s8, [#allocation4]
    $region45: #{tpu_custom_call.1} parent=1 // pred_fallthru
      _
    // Predicated region
    $region46: #{tpu_custom_call.1} parent=1 // pred_check
      _
    $region47: #{tpu_custom_call.1} parent=1 // pred_check_branch
      %1196 = sbr.rel (0) target = $region49
    $region48: #{tpu_custom_call.1} parent=1 // pred_region
      %1197 = dma.done [#allocation4], 256
    $region49: #{tpu_custom_call.1} parent=1 // pred_fallthru
      _
    %1198 = vsyncpa [#allocation3], 1
    %1199 = vsyncpa [#allocation6], 1
    %1200 = vsyncpa [#allocation4], 1

</llo_original>
